<compile_context>
chip_gen: v5e
topology: v5e:2x2
jax: 0.10.0
libtpu: 0.0.40
codegen_flags: <defaults>
</compile_context>

<pallas_src>
import math

import jax
import jax.numpy as jnp
from jax.experimental import pallas as pl
from jax.experimental.pallas import tpu as pltpu

_LANE = 128
_LOG2E = math.log2(math.e)
_NEG_BIG = -1e30  # finite mask value (avoids inf-inf NaN traps)


def _make_flash_kernel(scale, kv_valid, tk, need_kv_mask, compute_dtype):
    """Build the kernel body; all arguments are trace-time constants."""

    def kernel(q_ref, k_ref, v_ref, o_ref, q_sc, m_sc, l_sc, acc_sc):
        ki = pl.program_id(2)

        @pl.when(ki == 0)
        def _init():
            # Q block is resident across the kv loop: stage it once, already
            # scaled by log2(e)/sqrt(d_k) so the softmax can run in exp2.
            q_sc[...] = (q_ref[0].astype(jnp.float32) * scale).astype(compute_dtype)
            m_sc[...] = jnp.full(m_sc.shape, -jnp.inf, dtype=m_sc.dtype)
            l_sc[...] = jnp.zeros(l_sc.shape, dtype=l_sc.dtype)
            acc_sc[...] = jnp.zeros(acc_sc.shape, dtype=acc_sc.dtype)

        k = k_ref[0]  # (tk, d_k)  bf16
        v = v_ref[0]  # (tk, d_v)  bf16

        # Q @ K^T without an explicit transpose: contract the last dims so the
        # MXU handles the transposed contraction directly.  bf16 in, f32 acc.
        s = jax.lax.dot_general(
            q_sc[...], k,
            dimension_numbers=(((1,), (1,)), ((), ())),
            preferred_element_type=jnp.float32,
        )  # (tq, tk), scores in log2 space

        if need_kv_mask:
            kv_idx = ki * tk + jax.lax.broadcasted_iota(jnp.int32, s.shape, 1)
            s = jnp.where(kv_idx < kv_valid, s, _NEG_BIG)

        m_prev = m_sc[...]                                        # (tq, 1)
        m_new = jnp.maximum(m_prev, jnp.max(s, axis=-1, keepdims=True))
        alpha = jnp.exp2(m_prev - m_new)                          # (tq, 1)
        p = jnp.exp2(s - m_new)                                   # (tq, tk) f32

        l_sc[...] = alpha * l_sc[...] + jnp.sum(p, axis=-1, keepdims=True)
        acc_sc[...] = alpha * acc_sc[...] + jnp.dot(
            p.astype(compute_dtype), v, preferred_element_type=jnp.float32)
        m_sc[...] = m_new

        @pl.when(ki == pl.num_programs(2) - 1)
        def _finalize():
            inv_l = pl.reciprocal(l_sc[...], approx=True)         # EUP slot
            o_ref[0] = (acc_sc[...] * inv_l).astype(o_ref.dtype)

    return kernel


def _vmem_capacity_bytes():
    try:
        return int(pltpu.get_tpu_info().vmem_capacity_bytes)
    except Exception:
        return 64 * 1024 * 1024  # assume the smallest per-core VMEM (v7x)


def _round_up(x, m):
    return (x + m - 1) // m * m


def _choose_tile(s_pad, pref, align=_LANE):
    """Largest multiple of `align` that divides `s_pad` and is <= pref."""
    t = min(pref, s_pad)
    t -= t % align
    t = max(t, align)
    while t > align and s_pad % t != 0:
        t -= align
    return t


def scaled_dot_product_attention(q, k, v, *, tq=None, tk=None):
    """softmax(Q K^T / sqrt(d_k)) V.  Accepts (S, D) or batched (B, S, D)."""
    squeeze = q.ndim == 2
    if squeeze:
        q, k, v = q[None], k[None], v[None]

    B, Sq, Dk = q.shape
    Bk, Sk, Dk2 = k.shape
    Bv, Sv, Dv = v.shape
    assert B == Bk == Bv and Dk == Dk2 and Sk == Sv

    out_dtype = q.dtype
    compute_dtype = jnp.bfloat16  # MXU-native operands, f32 accumulation

    vmem_cap = _vmem_capacity_bytes()
    small_vmem = vmem_cap < 100 * 1024 * 1024   # v7x: 64 MiB per TensorCore
    pref_tq = 512 if small_vmem else 1024       # K/V HBM traffic ~ Sq/tq
    pref_tk = 256 if small_vmem else 512

    # Pad seq dims and feature dims to multiples of 128: lane-dense
    # loads/stores and MXU-aligned tiles.  The kv tail is masked in-kernel.
    Sq_p, Sk_p = _round_up(Sq, _LANE), _round_up(Sk, _LANE)
    Dk_p, Dv_p = _round_up(Dk, _LANE), _round_up(Dv, _LANE)

    if tq is None:
        tq = _choose_tile(Sq_p, pref_tq)
    if tk is None:
        tk = _choose_tile(Sk_p, pref_tk)
    assert Sq_p % tq == 0 and Sk_p % tk == 0, "tq/tk must divide padded seq lens"

    q_p = jnp.pad(q.astype(compute_dtype), ((0, 0), (0, Sq_p - Sq), (0, Dk_p - Dk)))
    k_p = jnp.pad(k.astype(compute_dtype), ((0, 0), (0, Sk_p - Sk), (0, Dk_p - Dk)))
    v_p = jnp.pad(v.astype(compute_dtype), ((0, 0), (0, Sk_p - Sk), (0, Dv_p - Dv)))

    # VMEM budget estimate (double-buffered I/O tiles + scratch + temporaries).
    in_isz = jnp.dtype(compute_dtype).itemsize
    out_isz = jnp.dtype(out_dtype).itemsize
    est = (2 * (tq * Dk_p + tk * Dk_p + tk * Dv_p) * in_isz   # dbl-buffered inputs
           + 2 * tq * Dv_p * out_isz                          # dbl-buffered output
           + tq * Dk_p * in_isz                               # staged scaled Q
           + (2 * tq + tq * Dv_p) * 4                         # m / l / acc (f32)
           + 3 * tq * tk * 4)                                 # s / p temporaries
    vmem_limit = min(int(vmem_cap * 3 // 4), max(32 * 1024 * 1024, 2 * est))

    # On v7x (2 TCs sharing HBM) shard the batch axis only when it exists, so
    # the two cores don't each re-stream the full K/V.
    if small_vmem and B > 1:
        dims = ("parallel", "arbitrary", "arbitrary")
    else:
        dims = ("parallel", "parallel", "arbitrary")

    scale = _LOG2E / math.sqrt(Dk)  # original d_k, not the padded one
    kernel = _make_flash_kernel(scale, Sk, tk, Sk_p != Sk, compute_dtype)

    grid = (B, Sq_p // tq, Sk_p // tk)

    out = pl.pallas_call(
        kernel,
        out_shape=jax.ShapeDtypeStruct((B, Sq_p, Dv_p), out_dtype),
        grid_spec=pltpu.PrefetchScalarGridSpec(
            num_scalar_prefetch=0,
            grid=grid,
            in_specs=[
                pl.BlockSpec((1, tq, Dk_p), lambda b, qi, ki: (b, qi, 0)),
                pl.BlockSpec((1, tk, Dk_p), lambda b, qi, ki: (b, ki, 0)),
                pl.BlockSpec((1, tk, Dv_p), lambda b, qi, ki: (b, ki, 0)),
            ],
            out_specs=pl.BlockSpec((1, tq, Dv_p), lambda b, qi, ki: (b, qi, 0)),
            scratch_shapes=[
                pltpu.VMEM((tq, Dk_p), compute_dtype),  # staged scaled Q
                pltpu.VMEM((tq, 1), jnp.float32),       # running max (log2 space)
                pltpu.VMEM((tq, 1), jnp.float32),       # running sum
                pltpu.VMEM((tq, Dv_p), jnp.float32),    # output accumulator
            ],
        ),
        compiler_params=pltpu.CompilerParams(
            dimension_semantics=dims,
            vmem_limit_bytes=vmem_limit,
        ),
    )(q_p, k_p, v_p)

    out = out[:, :Sq, :Dv]
    return out[0] if squeeze else out


def _reference(q, k, v):
    d_k = q.shape[-1]
    s = (q @ k.T) / jnp.sqrt(jnp.float32(d_k))
    return jax.nn.softmax(s, axis=-1) @ v


if __name__ == "__main__":
    # Shapes implied by the module: single-head Q/K/V of (seq_len, d_model).
    key = jax.random.PRNGKey(0)
    kq, kk, kv = jax.random.split(key, 3)
    seq_len, d_model = 8, 32
    Q = jax.random.normal(kq, (seq_len, d_model), dtype=jnp.float32)
    K = jax.random.normal(kk, (seq_len, d_model), dtype=jnp.float32)
    V = jax.random.normal(kv, (seq_len, d_model), dtype=jnp.float32)

    out = jax.block_until_ready(scaled_dot_product_attention(Q, K, V))
    ref = _reference(Q, K, V)
    assert out.shape == (seq_len, d_model)
    assert jnp.allclose(out, ref, atol=2e-2, rtol=2e-2), "mismatch vs reference (small)"

    # Larger, batched check exercising the tiled online-softmax path
    # (2 q tiles x 4 kv tiles per batch element, lane-dense 128-wide output).
    kq2, kk2, kv2 = jax.random.split(jax.random.PRNGKey(1), 3)
    B, Sq, Sk, D = 2, 256, 512, 128
    Q2 = jax.random.normal(kq2, (B, Sq, D), dtype=jnp.float32)
    K2 = jax.random.normal(kk2, (B, Sk, D), dtype=jnp.float32)
    V2 = jax.random.normal(kv2, (B, Sk, D), dtype=jnp.float32)
    out2 = jax.block_until_ready(
        scaled_dot_product_attention(Q2, K2, V2, tq=128, tk=128))
    ref2 = jax.vmap(_reference)(Q2, K2, V2)
    assert jnp.allclose(out2, ref2, atol=2e-2, rtol=2e-2), "mismatch vs reference (tiled)"

    # Awkward lengths: exercises the pad-to-128 + kv-tail-mask path.
    kq3, kk3, kv3 = jax.random.split(jax.random.PRNGKey(2), 3)
    Sq3, Sk3, D3 = 100, 200, 48
    Q3 = jax.random.normal(kq3, (Sq3, D3), dtype=jnp.float32)
    K3 = jax.random.normal(kk3, (Sk3, D3), dtype=jnp.float32)
    V3 = jax.random.normal(kv3, (Sk3, D3), dtype=jnp.float32)
    out3 = jax.block_until_ready(
        scaled_dot_product_attention(Q3, K3, V3, tk=128))
    ref3 = _reference(Q3, K3, V3)
    assert out3.shape == (Sq3, D3)
    assert jnp.allclose(out3, ref3, atol=2e-2, rtol=2e-2), "mismatch vs reference (ragged)"

    print("KERNEL_OK")
</pallas_src>

<mosaic_0001>
module attributes {stable_mosaic.version = 11 : i64} {
  func.func @kernel(%arg0: i32, %arg1: i32, %arg2: i32, %arg3: memref<1x128x128xbf16, #tpu.memory_space<vmem>>, %arg4: memref<1x128x128xbf16, #tpu.memory_space<vmem>>, %arg5: memref<1x128x128xbf16, #tpu.memory_space<vmem>>, %arg6: memref<1x128x128xf32, #tpu.memory_space<vmem>>, %arg7: memref<128x128xbf16, #tpu.memory_space<vmem>>, %arg8: memref<128x1xf32, #tpu.memory_space<vmem>>, %arg9: memref<128x1xf32, #tpu.memory_space<vmem>>, %arg10: memref<128x128xf32, #tpu.memory_space<vmem>>) attributes {dimension_semantics = [#tpu.dimension_semantics<parallel>, #tpu.dimension_semantics<parallel>, #tpu.dimension_semantics<arbitrary>], iteration_bounds = array<i64: 1, 1, 1>, scalar_prefetch = 0 : i64, scratch_operands = 4 : i64, tpu.core_type = #tpu.core_type<tc>, window_params = [{transform_indices = @transform_0, window_bounds = array<i64: 1, 128, 128>}, {transform_indices = @transform_1, window_bounds = array<i64: 1, 128, 128>}, {transform_indices = @transform_2, window_bounds = array<i64: 1, 128, 128>}, {transform_indices = @transform_3, window_bounds = array<i64: 1, 128, 128>}]} {
    %c0_i32 = arith.constant 0 : i32
    %0 = arith.cmpi eq, %arg2, %c0_i32 : i32
    %1 = arith.extui %0 : i1 to i32
    %c0_i32_0 = arith.constant 0 : i32
    %2 = arith.cmpi ne, %1, %c0_i32_0 : i32
    scf.if %2 {
      %c0_26 = arith.constant 0 : index
      %c0_27 = arith.constant 0 : index
      %c0_28 = arith.constant 0 : index
      %43 = vector.load %arg3[%c0_26, %c0_27, %c0_28] : memref<1x128x128xbf16, #tpu.memory_space<vmem>>, vector<1x128x128xbf16>
      %44 = vector.shape_cast %43 : vector<1x128x128xbf16> to vector<128x128xbf16>
      %45 = arith.extf %44 : vector<128x128xbf16> to vector<128x128xf32>
      %cst_29 = arith.constant 0.255034864 : f32
      %46 = vector.broadcast %cst_29 : f32 to vector<128x128xf32>
      %47 = arith.mulf %45, %46 : vector<128x128xf32>
      %48 = arith.truncf %47 : vector<128x128xf32> to vector<128x128xbf16>
      %c0_30 = arith.constant 0 : index
      %c0_31 = arith.constant 0 : index
      %49 = vector.load %arg7[%c0_30, %c0_31] : memref<128x128xbf16, #tpu.memory_space<vmem>>, vector<128x128xbf16>
      tpu.vector_store %arg7[%c0_30, %c0_31], %48 {strides = array<i32>} : memref<128x128xbf16, #tpu.memory_space<vmem>>, vector<128x128xbf16>,
      %cst_32 = arith.constant 0xFF800000 : f32
      %50 = vector.broadcast %cst_32 : f32 to vector<128x1xf32>
      %c0_33 = arith.constant 0 : index
      %c0_34 = arith.constant 0 : index
      %51 = vector.load %arg8[%c0_33, %c0_34] : memref<128x1xf32, #tpu.memory_space<vmem>>, vector<128x1xf32>
      tpu.vector_store %arg8[%c0_33, %c0_34], %50 {strides = array<i32>} : memref<128x1xf32, #tpu.memory_space<vmem>>, vector<128x1xf32>,
      %cst_35 = arith.constant 0.000000e+00 : f32
      %52 = vector.broadcast %cst_35 : f32 to vector<128x1xf32>
      %c0_36 = arith.constant 0 : index
      %c0_37 = arith.constant 0 : index
      %53 = vector.load %arg9[%c0_36, %c0_37] : memref<128x1xf32, #tpu.memory_space<vmem>>, vector<128x1xf32>
      tpu.vector_store %arg9[%c0_36, %c0_37], %52 {strides = array<i32>} : memref<128x1xf32, #tpu.memory_space<vmem>>, vector<128x1xf32>,
      %cst_38 = arith.constant 0.000000e+00 : f32
      %54 = vector.broadcast %cst_38 : f32 to vector<128x128xf32>
      %c0_39 = arith.constant 0 : index
      %c0_40 = arith.constant 0 : index
      %55 = vector.load %arg10[%c0_39, %c0_40] : memref<128x128xf32, #tpu.memory_space<vmem>>, vector<128x128xf32>
      tpu.vector_store %arg10[%c0_39, %c0_40], %54 {strides = array<i32>} : memref<128x128xf32, #tpu.memory_space<vmem>>, vector<128x128xf32>,
    } else {
    }
    %c0 = arith.constant 0 : index
    %c0_1 = arith.constant 0 : index
    %c0_2 = arith.constant 0 : index
    %3 = vector.load %arg4[%c0, %c0_1, %c0_2] : memref<1x128x128xbf16, #tpu.memory_space<vmem>>, vector<1x128x128xbf16>
    %4 = vector.shape_cast %3 : vector<1x128x128xbf16> to vector<128x128xbf16>
    %c0_3 = arith.constant 0 : index
    %c0_4 = arith.constant 0 : index
    %c0_5 = arith.constant 0 : index
    %5 = vector.load %arg5[%c0_3, %c0_4, %c0_5] : memref<1x128x128xbf16, #tpu.memory_space<vmem>>, vector<1x128x128xbf16>
    %6 = vector.shape_cast %5 : vector<1x128x128xbf16> to vector<128x128xbf16>
    %c0_6 = arith.constant 0 : index
    %c0_7 = arith.constant 0 : index
    %7 = vector.load %arg7[%c0_6, %c0_7] : memref<128x128xbf16, #tpu.memory_space<vmem>>, vector<128x128xbf16>
    %cst = arith.constant dense<0.000000e+00> : vector<128x128xf32>
    %8 = tpu.matmul %7, %4, %cst {dimension_numbers = #tpu.dot_dimension_numbers<[1], [1], [0], [0], [0, 0, 1, 0], [], []>} : vector<128x128xbf16>, vector<128x128xbf16>, vector<128x128xf32> -> vector<128x128xf32>
    %c128_i32 = arith.constant 128 : i32
    %9 = arith.muli %arg2, %c128_i32 : i32
    %10 = tpu.iota {dimensions = array<i32: 1>} : vector<128x128xi32>
    %11 = vector.broadcast %9 : i32 to vector<128x128xi32>
    %12 = arith.addi %11, %10 : vector<128x128xi32>
    %c8_i32 = arith.constant 8 : i32
    %13 = vector.broadcast %c8_i32 : i32 to vector<128x128xi32>
    %14 = arith.cmpi slt, %12, %13 : vector<128x128xi32>
    %cst_8 = arith.constant -1.000000e+30 : f32
    %15 = vector.broadcast %cst_8 : f32 to vector<128x128xf32>
    %16 = arith.select %14, %8, %15 : vector<128x128xi1>, vector<128x128xf32>
    %c0_9 = arith.constant 0 : index
    %c0_10 = arith.constant 0 : index
    %17 = vector.load %arg8[%c0_9, %c0_10] : memref<128x1xf32, #tpu.memory_space<vmem>>, vector<128x1xf32>
    %cst_11 = arith.constant dense<0xFF800000> : vector<128xf32>
    %18 = vector.multi_reduction <maximumf>, %16, %cst_11 [1] : vector<128x128xf32> to vector<128xf32>
    %19 = vector.shape_cast %18 : vector<128xf32> to vector<128x1xf32>
    %20 = arith.maximumf %17, %19 : vector<128x1xf32>
    %21 = arith.subf %17, %20 : vector<128x1xf32>
    %22 = math.exp2 %21 : vector<128x1xf32>
    %23 = vector.broadcast %20 : vector<128x1xf32> to vector<128x128xf32>
    %24 = arith.subf %16, %23 : vector<128x128xf32>
    %25 = math.exp2 %24 : vector<128x128xf32>
    %c0_12 = arith.constant 0 : index
    %c0_13 = arith.constant 0 : index
    %26 = vector.load %arg9[%c0_12, %c0_13] : memref<128x1xf32, #tpu.memory_space<vmem>>, vector<128x1xf32>
    %27 = arith.mulf %22, %26 : vector<128x1xf32>
    %cst_14 = arith.constant dense<0.000000e+00> : vector<128xf32>
    %28 = vector.multi_reduction <add>, %25, %cst_14 [1] : vector<128x128xf32> to vector<128xf32>
    %29 = vector.shape_cast %28 : vector<128xf32> to vector<128x1xf32>
    %30 = arith.addf %27, %29 : vector<128x1xf32>
    %c0_15 = arith.constant 0 : index
    %c0_16 = arith.constant 0 : index
    %31 = vector.load %arg9[%c0_15, %c0_16] : memref<128x1xf32, #tpu.memory_space<vmem>>, vector<128x1xf32>
    tpu.vector_store %arg9[%c0_15, %c0_16], %30 {strides = array<i32>} : memref<128x1xf32, #tpu.memory_space<vmem>>, vector<128x1xf32>,
    %c0_17 = arith.constant 0 : index
    %c0_18 = arith.constant 0 : index
    %32 = vector.load %arg10[%c0_17, %c0_18] : memref<128x128xf32, #tpu.memory_space<vmem>>, vector<128x128xf32>
    %33 = vector.broadcast %22 : vector<128x1xf32> to vector<128x128xf32>
    %34 = arith.mulf %33, %32 : vector<128x128xf32>
    %35 = arith.truncf %25 : vector<128x128xf32> to vector<128x128xbf16>
    %cst_19 = arith.constant dense<0.000000e+00> : vector<128x128xf32>
    %36 = tpu.matmul %35, %6, %cst_19 {dimension_numbers = #tpu.dot_dimension_numbers<[1], [0], [0], [1], [0, 0, 1, 1], [], []>} : vector<128x128xbf16>, vector<128x128xbf16>, vector<128x128xf32> -> vector<128x128xf32>
    %37 = arith.addf %34, %36 : vector<128x128xf32>
    %c0_20 = arith.constant 0 : index
    %c0_21 = arith.constant 0 : index
    %38 = vector.load %arg10[%c0_20, %c0_21] : memref<128x128xf32, #tpu.memory_space<vmem>>, vector<128x128xf32>
    tpu.vector_store %arg10[%c0_20, %c0_21], %37 {strides = array<i32>} : memref<128x128xf32, #tpu.memory_space<vmem>>, vector<128x128xf32>,
    %c0_22 = arith.constant 0 : index
    %c0_23 = arith.constant 0 : index
    %39 = vector.load %arg8[%c0_22, %c0_23] : memref<128x1xf32, #tpu.memory_space<vmem>>, vector<128x1xf32>
    tpu.vector_store %arg8[%c0_22, %c0_23], %20 {strides = array<i32>} : memref<128x1xf32, #tpu.memory_space<vmem>>, vector<128x1xf32>,
    %c0_i32_24 = arith.constant 0 : i32
    %40 = arith.cmpi eq, %arg2, %c0_i32_24 : i32
    %41 = arith.extui %40 : i1 to i32
    %c0_i32_25 = arith.constant 0 : i32
    %42 = arith.cmpi ne, %41, %c0_i32_25 : i32
    scf.if %42 {
      %c0_26 = arith.constant 0 : index
      %c0_27 = arith.constant 0 : index
      %43 = vector.load %arg9[%c0_26, %c0_27] : memref<128x1xf32, #tpu.memory_space<vmem>>, vector<128x1xf32>
      %44 = tpu.reciprocal %43 {approx = true} : vector<128x1xf32> -> vector<128x1xf32>
      %c0_28 = arith.constant 0 : index
      %c0_29 = arith.constant 0 : index
      %45 = vector.load %arg10[%c0_28, %c0_29] : memref<128x128xf32, #tpu.memory_space<vmem>>, vector<128x128xf32>
      %46 = vector.broadcast %44 : vector<128x1xf32> to vector<128x128xf32>
      %47 = arith.mulf %45, %46 : vector<128x128xf32>
      %c0_30 = arith.constant 0 : index
      %c0_31 = arith.constant 0 : index
      %c0_32 = arith.constant 0 : index
      %48 = vector.load %arg6[%c0_30, %c0_31, %c0_32] : memref<1x128x128xf32, #tpu.memory_space<vmem>>, vector<1x128x128xf32>
      %49 = vector.shape_cast %48 : vector<1x128x128xf32> to vector<128x128xf32>
      %50 = vector.shape_cast %47 : vector<128x128xf32> to vector<1x128x128xf32>
      tpu.vector_store %arg6[%c0_30, %c0_31, %c0_32], %50 {strides = array<i32>} : memref<1x128x128xf32, #tpu.memory_space<vmem>>, vector<1x128x128xf32>,
    } else {
    }
    return
  }
  func.func @transform_0(%arg0: i32, %arg1: i32, %arg2: i32) -> (i32, i32, i32) {
    %c0_i32 = arith.constant 0 : i32
    %c0_i32_0 = arith.constant 0 : i32
    return %arg0, %arg1, %c0_i32 : i32, i32, i32
  }
  func.func @transform_1(%arg0: i32, %arg1: i32, %arg2: i32) -> (i32, i32, i32) {
    %c0_i32 = arith.constant 0 : i32
    %c0_i32_0 = arith.constant 0 : i32
    return %arg0, %arg2, %c0_i32 : i32, i32, i32
  }
  func.func @transform_2(%arg0: i32, %arg1: i32, %arg2: i32) -> (i32, i32, i32) {
    %c0_i32 = arith.constant 0 : i32
    %c0_i32_0 = arith.constant 0 : i32
    return %arg0, %arg2, %c0_i32 : i32, i32, i32
  }
  func.func @transform_3(%arg0: i32, %arg1: i32, %arg2: i32) -> (i32, i32, i32) {
    %c0_i32 = arith.constant 0 : i32
    %c0_i32_0 = arith.constant 0 : i32
    return %arg0, %arg1, %c0_i32 : i32, i32, i32
  }
}

</mosaic_0001>

<llo_original>
// kernel: tpu_custom_call.1
$region0: #{tpu_custom_call.1}
  #allocation0 [shape = 'u32[]', space=smem, size = 0x4, offset = 0x4, fixed_abs, tag = 'smem constant byte address 0x4 - core index']
  #allocation1 [shape = 'u32[72,128]{1,0:T(1,128)}', space=vmem, size = 0x9000, scoped, tag = 'internal scratch']
  #allocation2 [shape = 'bf16[128,128]{1,0:T(8,128)(2,1)}', space=vmem, size = 0x8000, scoped, tag = 'scratch operand']
  #allocation3 [shape = 'f32[128,1]{1,0:T(8,128)}', space=vmem, size = 0x10000, scoped, tag = 'scratch operand']
  #allocation4 [shape = 'f32[128,1]{1,0:T(8,128)}', space=vmem, size = 0x10000, scoped, tag = 'scratch operand']
  #allocation5 [shape = 'f32[128,128]{1,0:T(8,128)}', space=vmem, size = 0x10000, scoped, tag = 'scratch operand']
  %s0 = inlined_call_operand.hbm [shape: bf16[1,128,128], index: 0, kind: input, shape index: {}]
  %s1 = inlined_call_operand.hbm [shape: bf16[1,128,128], index: 1, kind: input, shape index: {}]
  %s2 = inlined_call_operand.hbm [shape: bf16[1,128,128], index: 2, kind: input, shape index: {}]
  %s3 = inlined_call_operand.hbm [shape: f32[1,128,128], index: 3, kind: output, shape index: {}]
  %s4 = sld [smem:[#allocation0]]
  $region42: #{tpu_custom_call.1} parent=0
    _
  %s6 = ssub.s32 1, %s4
  %s7 = scalar_select 0, %s6, %s4
  $region1: #{tpu_custom_call.1} parent=0
    #allocation6 [shape = 'u8[32768]{0}', space=vmem, size = 0x8000, scoped, tag = 'input window, operand 0, single buffered']
    #allocation7 [shape = 's32[1]{0}', space=sflag, size = 0x4, scoped, tag = 'scoped memory for tpu_custom_call.1']
    #allocation8 [shape = 's32[1]{0}', space=sflag, size = 0x4, scoped, tag = 'scoped memory for tpu_custom_call.1']
    #allocation9 [shape = 'u8[32768]{0}', space=vmem, size = 0x8000, scoped, tag = 'input window, operand 1, single buffered']
    #allocation10 [shape = 's32[1]{0}', space=sflag, size = 0x4, scoped, tag = 'scoped memory for tpu_custom_call.1']
    #allocation11 [shape = 'u8[32768]{0}', space=vmem, size = 0x8000, scoped, tag = 'input window, operand 2, single buffered']
    #allocation12 [shape = 'u8[65536]{0}', space=vmem, size = 0x10000, scoped, tag = 'output window, operand 0, single buffered']
    %8 = vsyncpa [#allocation7], 0
    %9 = vsyncpa [#allocation10], 0
    %10 = vsyncpa [#allocation8], 0
    // Predicated region
    $region2: #{tpu_custom_call.1} parent=1 // pred_check
      _
    $region3: #{tpu_custom_call.1} parent=1 // pred_check_branch
      %12 = sbr.rel (0) target = $region5
    $region4: #{tpu_custom_call.1} parent=1 // pred_region
      %14 = vsyncadd [#allocation7], 0
      %s15 = sshll.u32 %s0, 4
      %s16 = int_to_ptr.hbm [resolvable:$true] %s15
      %s17 = sshll.u32 [#allocation6], 4
      %s18 = int_to_ptr.vmem [resolvable:$true] %s17
      %23 = dma.hbm_to_vmem [thread:$0]  %s16, 1024, %s18, [#allocation7], 64, 64, 4
    $region5: #{tpu_custom_call.1} parent=1 // pred_fallthru
      _
    // Predicated region
    $region6: #{tpu_custom_call.1} parent=1 // pred_check
      _
    $region7: #{tpu_custom_call.1} parent=1 // pred_check_branch
      %25 = sbr.rel (0) target = $region9
    $region8: #{tpu_custom_call.1} parent=1 // pred_region
      %27 = vsyncadd [#allocation10], 0
      %s28 = sshll.u32 %s1, 4
      %s29 = int_to_ptr.hbm [resolvable:$true] %s28
      %s30 = sshll.u32 [#allocation9], 4
      %s31 = int_to_ptr.vmem [resolvable:$true] %s30
      %36 = dma.hbm_to_vmem [thread:$0]  %s29, 1024, %s31, [#allocation10], 64, 64, 4
    $region9: #{tpu_custom_call.1} parent=1 // pred_fallthru
      _
    // Predicated region
    $region10: #{tpu_custom_call.1} parent=1 // pred_check
      _
    $region11: #{tpu_custom_call.1} parent=1 // pred_check_branch
      %38 = sbr.rel (0) target = $region13
    $region12: #{tpu_custom_call.1} parent=1 // pred_region
      %40 = vsyncadd [#allocation10], 0
      %s41 = sshll.u32 %s2, 4
      %s42 = int_to_ptr.hbm [resolvable:$true] %s41
      %s43 = sshll.u32 [#allocation11], 4
      %s44 = int_to_ptr.vmem [resolvable:$true] %s43
      %49 = dma.hbm_to_vmem [thread:$0]  %s42, 1024, %s44, [#allocation10], 64, 64, 4
    $region13: #{tpu_custom_call.1} parent=1 // pred_fallthru
      _
    // Predicated region
    $region14: #{tpu_custom_call.1} parent=1 // pred_check
      _
    $region15: #{tpu_custom_call.1} parent=1 // pred_check_branch
      %51 = sbr.rel (0) target = $region17
    $region16: #{tpu_custom_call.1} parent=1 // pred_region
      %53 = dma.done [#allocation7], 1024
    $region17: #{tpu_custom_call.1} parent=1 // pred_fallthru
      _
    // Predicated region
    $region18: #{tpu_custom_call.1} parent=1 // pred_check
      _
    $region19: #{tpu_custom_call.1} parent=1 // pred_check_branch
      %55 = sbr.rel (0) target = $region21
    $region20: #{tpu_custom_call.1} parent=1 // pred_region
      %57 = dma.done [#allocation10], 1024
    $region21: #{tpu_custom_call.1} parent=1 // pred_fallthru
      _
    // Predicated region
    $region22: #{tpu_custom_call.1} parent=1 // pred_check
      _
    $region23: #{tpu_custom_call.1} parent=1 // pred_check_branch
      %59 = sbr.rel (0) target = $region25
    $region24: #{tpu_custom_call.1} parent=1 // pred_region
      %61 = dma.done [#allocation10], 1024
    $region25: #{tpu_custom_call.1} parent=1 // pred_fallthru
      _
    %p62 = scmp.eq.s32.totalorder 0, 0
    // Predicated region
    $region26: #{tpu_custom_call.1} parent=1 // pred_check
      %p63 = pneg %p62
    $region27: #{tpu_custom_call.1} parent=1 // pred_check_branch
      %65 = sbr.rel (%p63) target = $region29
    $region28: #{tpu_custom_call.1} parent=1 // pred_region
      %v66 = vld [vmem:[#allocation6] sm:$0xf]
      %v67 = vld [vmem:[#allocation6 + $0x4] sm:$0xf]
      %v68 = vld [vmem:[#allocation6 + $0x8] sm:$0xf]
      %v69 = vld [vmem:[#allocation6 + $0xc] sm:$0xf]
      %v70 = vld [vmem:[#allocation6 + $0x10] sm:$0xf]
      %v71 = vld [vmem:[#allocation6 + $0x14] sm:$0xf]
      %v72 = vld [vmem:[#allocation6 + $0x18] sm:$0xf]
      %v73 = vld [vmem:[#allocation6 + $0x1c] sm:$0xf]
      %v74 = vld [vmem:[#allocation6 + $0x20] sm:$0xf]
      %v75 = vld [vmem:[#allocation6 + $0x24] sm:$0xf]
      %v76 = vld [vmem:[#allocation6 + $0x28] sm:$0xf]
      %v77 = vld [vmem:[#allocation6 + $0x2c] sm:$0xf]
      %v78 = vld [vmem:[#allocation6 + $0x30] sm:$0xf]
      %v79 = vld [vmem:[#allocation6 + $0x34] sm:$0xf]
      %v80 = vld [vmem:[#allocation6 + $0x38] sm:$0xf]
      %v81 = vld [vmem:[#allocation6 + $0x3c] sm:$0xf]
      %v82 = vunpack.c.l.bf16 %v66
      %v83 = vunpack.c.l.bf16 %v67
      %v84 = vunpack.c.l.bf16 %v68
      %v85 = vunpack.c.l.bf16 %v69
      %v86 = vunpack.c.l.bf16 %v70
      %v87 = vunpack.c.l.bf16 %v71
      %v88 = vunpack.c.l.bf16 %v72
      %v89 = vunpack.c.l.bf16 %v73
      %v90 = vunpack.c.l.bf16 %v74
      %v91 = vunpack.c.l.bf16 %v75
      %v92 = vunpack.c.l.bf16 %v76
      %v93 = vunpack.c.l.bf16 %v77
      %v94 = vunpack.c.l.bf16 %v78
      %v95 = vunpack.c.l.bf16 %v79
      %v96 = vunpack.c.l.bf16 %v80
      %v97 = vunpack.c.l.bf16 %v81
      %v98 = vmul.f32 %v82, 0.25503486
      %v99 = vmul.f32 %v83, 0.25503486
      %v100 = vmul.f32 %v84, 0.25503486
      %v101 = vmul.f32 %v85, 0.25503486
      %v102 = vmul.f32 %v86, 0.25503486
      %v103 = vmul.f32 %v87, 0.25503486
      %v104 = vmul.f32 %v88, 0.25503486
      %v105 = vmul.f32 %v89, 0.25503486
      %v106 = vmul.f32 %v90, 0.25503486
      %v107 = vmul.f32 %v91, 0.25503486
      %v108 = vmul.f32 %v92, 0.25503486
      %v109 = vmul.f32 %v93, 0.25503486
      %v110 = vmul.f32 %v94, 0.25503486
      %v111 = vmul.f32 %v95, 0.25503486
      %v112 = vmul.f32 %v96, 0.25503486
      %v113 = vmul.f32 %v97, 0.25503486
      %v114 = vpack.c.bf16 %v98, %v98
      %v115 = vpack.c.bf16 %v99, %v99
      %v116 = vpack.c.bf16 %v100, %v100
      %v117 = vpack.c.bf16 %v101, %v101
      %v118 = vpack.c.bf16 %v102, %v102
      %v119 = vpack.c.bf16 %v103, %v103
      %v120 = vpack.c.bf16 %v104, %v104
      %v121 = vpack.c.bf16 %v105, %v105
      %v122 = vpack.c.bf16 %v106, %v106
      %v123 = vpack.c.bf16 %v107, %v107
      %v124 = vpack.c.bf16 %v108, %v108
      %v125 = vpack.c.bf16 %v109, %v109
      %v126 = vpack.c.bf16 %v110, %v110
      %v127 = vpack.c.bf16 %v111, %v111
      %v128 = vpack.c.bf16 %v112, %v112
      %v129 = vpack.c.bf16 %v113, %v113
      %130 = vst [vmem:[#allocation2] sm:$0xf] %v114
      %131 = vst [vmem:[#allocation2 + $0x4] sm:$0xf] %v115
      %132 = vst [vmem:[#allocation2 + $0x8] sm:$0xf] %v116
      %133 = vst [vmem:[#allocation2 + $0xc] sm:$0xf] %v117
      %134 = vst [vmem:[#allocation2 + $0x10] sm:$0xf] %v118
      %135 = vst [vmem:[#allocation2 + $0x14] sm:$0xf] %v119
      %136 = vst [vmem:[#allocation2 + $0x18] sm:$0xf] %v120
      %137 = vst [vmem:[#allocation2 + $0x1c] sm:$0xf] %v121
      %138 = vst [vmem:[#allocation2 + $0x20] sm:$0xf] %v122
      %139 = vst [vmem:[#allocation2 + $0x24] sm:$0xf] %v123
      %140 = vst [vmem:[#allocation2 + $0x28] sm:$0xf] %v124
      %141 = vst [vmem:[#allocation2 + $0x2c] sm:$0xf] %v125
      %142 = vst [vmem:[#allocation2 + $0x30] sm:$0xf] %v126
      %143 = vst [vmem:[#allocation2 + $0x34] sm:$0xf] %v127
      %144 = vst [vmem:[#allocation2 + $0x38] sm:$0xf] %v128
      %145 = vst [vmem:[#allocation2 + $0x3c] sm:$0xf] %v129
      %vm146 = vcmask 7168
      %147 = vst.msk [vmem:[#allocation3] sm:$0xff] %vm146, -inf
      %148 = vst.msk [vmem:[#allocation3 + $0x8] sm:$0xff] %vm146, -inf
      %149 = vst.msk [vmem:[#allocation3 + $0x10] sm:$0xff] %vm146, -inf
      %150 = vst.msk [vmem:[#allocation3 + $0x18] sm:$0xff] %vm146, -inf
      %151 = vst.msk [vmem:[#allocation3 + $0x20] sm:$0xff] %vm146, -inf
      %152 = vst.msk [vmem:[#allocation3 + $0x28] sm:$0xff] %vm146, -inf
      %153 = vst.msk [vmem:[#allocation3 + $0x30] sm:$0xff] %vm146, -inf
      %154 = vst.msk [vmem:[#allocation3 + $0x38] sm:$0xff] %vm146, -inf
      %155 = vst.msk [vmem:[#allocation3 + $0x40] sm:$0xff] %vm146, -inf
      %156 = vst.msk [vmem:[#allocation3 + $0x48] sm:$0xff] %vm146, -inf
      %157 = vst.msk [vmem:[#allocation3 + $0x50] sm:$0xff] %vm146, -inf
      %158 = vst.msk [vmem:[#allocation3 + $0x58] sm:$0xff] %vm146, -inf
      %159 = vst.msk [vmem:[#allocation3 + $0x60] sm:$0xff] %vm146, -inf
      %160 = vst.msk [vmem:[#allocation3 + $0x68] sm:$0xff] %vm146, -inf
      %161 = vst.msk [vmem:[#allocation3 + $0x70] sm:$0xff] %vm146, -inf
      %162 = vst.msk [vmem:[#allocation3 + $0x78] sm:$0xff] %vm146, -inf
      %163 = vst.msk [vmem:[#allocation4] sm:$0xff] %vm146, 0.0
      %164 = vst.msk [vmem:[#allocation4 + $0x8] sm:$0xff] %vm146, 0.0
      %165 = vst.msk [vmem:[#allocation4 + $0x10] sm:$0xff] %vm146, 0.0
      %166 = vst.msk [vmem:[#allocation4 + $0x18] sm:$0xff] %vm146, 0.0
      %167 = vst.msk [vmem:[#allocation4 + $0x20] sm:$0xff] %vm146, 0.0
      %168 = vst.msk [vmem:[#allocation4 + $0x28] sm:$0xff] %vm146, 0.0
      %169 = vst.msk [vmem:[#allocation4 + $0x30] sm:$0xff] %vm146, 0.0
      %170 = vst.msk [vmem:[#allocation4 + $0x38] sm:$0xff] %vm146, 0.0
      %171 = vst.msk [vmem:[#allocation4 + $0x40] sm:$0xff] %vm146, 0.0
      %172 = vst.msk [vmem:[#allocation4 + $0x48] sm:$0xff] %vm146, 0.0
      %173 = vst.msk [vmem:[#allocation4 + $0x50] sm:$0xff] %vm146, 0.0
      %174 = vst.msk [vmem:[#allocation4 + $0x58] sm:$0xff] %vm146, 0.0
      %175 = vst.msk [vmem:[#allocation4 + $0x60] sm:$0xff] %vm146, 0.0
      %176 = vst.msk [vmem:[#allocation4 + $0x68] sm:$0xff] %vm146, 0.0
      %177 = vst.msk [vmem:[#allocation4 + $0x70] sm:$0xff] %vm146, 0.0
      %178 = vst.msk [vmem:[#allocation4 + $0x78] sm:$0xff] %vm146, 0.0
      %179 = vst [vmem:[#allocation5] sm:$0xff] 0.0
      %180 = vst [vmem:[#allocation5 + $0x8] sm:$0xff] 0.0
      %181 = vst [vmem:[#allocation5 + $0x10] sm:$0xff] 0.0
      %182 = vst [vmem:[#allocation5 + $0x18] sm:$0xff] 0.0
      %183 = vst [vmem:[#allocation5 + $0x20] sm:$0xff] 0.0
      %184 = vst [vmem:[#allocation5 + $0x28] sm:$0xff] 0.0
      %185 = vst [vmem:[#allocation5 + $0x30] sm:$0xff] 0.0
      %186 = vst [vmem:[#allocation5 + $0x38] sm:$0xff] 0.0
      %187 = vst [vmem:[#allocation5 + $0x40] sm:$0xff] 0.0
      %188 = vst [vmem:[#allocation5 + $0x48] sm:$0xff] 0.0
      %189 = vst [vmem:[#allocation5 + $0x50] sm:$0xff] 0.0
      %190 = vst [vmem:[#allocation5 + $0x58] sm:$0xff] 0.0
      %191 = vst [vmem:[#allocation5 + $0x60] sm:$0xff] 0.0
      %192 = vst [vmem:[#allocation5 + $0x68] sm:$0xff] 0.0
      %193 = vst [vmem:[#allocation5 + $0x70] sm:$0xff] 0.0
      %194 = vst [vmem:[#allocation5 + $0x78] sm:$0xff] 0.0
    $region29: #{tpu_custom_call.1} parent=1 // pred_fallthru
      _
    %v195 = vld [vmem:[#allocation9] sm:$0xf]
    %v196 = vld [vmem:[#allocation9 + $0x4] sm:$0xf]
    %v197 = vld [vmem:[#allocation9 + $0x8] sm:$0xf]
    %v198 = vld [vmem:[#allocation9 + $0xc] sm:$0xf]
    %v199 = vld [vmem:[#allocation9 + $0x10] sm:$0xf]
    %v200 = vld [vmem:[#allocation9 + $0x14] sm:$0xf]
    %v201 = vld [vmem:[#allocation9 + $0x18] sm:$0xf]
    %v202 = vld [vmem:[#allocation9 + $0x1c] sm:$0xf]
    %v203 = vld [vmem:[#allocation9 + $0x20] sm:$0xf]
    %v204 = vld [vmem:[#allocation9 + $0x24] sm:$0xf]
    %v205 = vld [vmem:[#allocation9 + $0x28] sm:$0xf]
    %v206 = vld [vmem:[#allocation9 + $0x2c] sm:$0xf]
    %v207 = vld [vmem:[#allocation9 + $0x30] sm:$0xf]
    %v208 = vld [vmem:[#allocation9 + $0x34] sm:$0xf]
    %v209 = vld [vmem:[#allocation9 + $0x38] sm:$0xf]
    %v210 = vld [vmem:[#allocation9 + $0x3c] sm:$0xf]
    %v211 = vld [vmem:[#allocation11] sm:$0xf]
    %v212 = vld [vmem:[#allocation11 + $0x4] sm:$0xf]
    %v213 = vld [vmem:[#allocation11 + $0x8] sm:$0xf]
    %v214 = vld [vmem:[#allocation11 + $0xc] sm:$0xf]
    %v215 = vld [vmem:[#allocation11 + $0x10] sm:$0xf]
    %v216 = vld [vmem:[#allocation11 + $0x14] sm:$0xf]
    %v217 = vld [vmem:[#allocation11 + $0x18] sm:$0xf]
    %v218 = vld [vmem:[#allocation11 + $0x1c] sm:$0xf]
    %v219 = vld [vmem:[#allocation11 + $0x20] sm:$0xf]
    %v220 = vld [vmem:[#allocation11 + $0x24] sm:$0xf]
    %v221 = vld [vmem:[#allocation11 + $0x28] sm:$0xf]
    %v222 = vld [vmem:[#allocation11 + $0x2c] sm:$0xf]
    %v223 = vld [vmem:[#allocation11 + $0x30] sm:$0xf]
    %v224 = vld [vmem:[#allocation11 + $0x34] sm:$0xf]
    %v225 = vld [vmem:[#allocation11 + $0x38] sm:$0xf]
    %v226 = vld [vmem:[#allocation11 + $0x3c] sm:$0xf]
    %v227 = vld [vmem:[#allocation2] sm:$0xf]
    %v228 = vld [vmem:[#allocation2 + $0x4] sm:$0xf]
    %v229 = vld [vmem:[#allocation2 + $0x8] sm:$0xf]
    %v230 = vld [vmem:[#allocation2 + $0xc] sm:$0xf]
    %v231 = vld [vmem:[#allocation2 + $0x10] sm:$0xf]
    %v232 = vld [vmem:[#allocation2 + $0x14] sm:$0xf]
    %v233 = vld [vmem:[#allocation2 + $0x18] sm:$0xf]
    %v234 = vld [vmem:[#allocation2 + $0x1c] sm:$0xf]
    %v235 = vld [vmem:[#allocation2 + $0x20] sm:$0xf]
    %v236 = vld [vmem:[#allocation2 + $0x24] sm:$0xf]
    %v237 = vld [vmem:[#allocation2 + $0x28] sm:$0xf]
    %v238 = vld [vmem:[#allocation2 + $0x2c] sm:$0xf]
    %v239 = vld [vmem:[#allocation2 + $0x30] sm:$0xf]
    %v240 = vld [vmem:[#allocation2 + $0x34] sm:$0xf]
    %v241 = vld [vmem:[#allocation2 + $0x38] sm:$0xf]
    %v242 = vld [vmem:[#allocation2 + $0x3c] sm:$0xf]
    %v259 = vunpack.c.l.b16 %v227
    %v260 = vunpack.c.l.b16 %v228
    %v261 = vunpack.c.l.b16 %v229
    %v262 = vunpack.c.l.b16 %v230
    %v263 = vunpack.c.l.b16 %v231
    %v264 = vunpack.c.l.b16 %v232
    %v265 = vunpack.c.l.b16 %v233
    %v266 = vunpack.c.l.b16 %v234
    %v267 = vunpack.c.l.b16 %v235
    %v268 = vunpack.c.l.b16 %v236
    %v269 = vunpack.c.l.b16 %v237
    %v270 = vunpack.c.l.b16 %v238
    %v271 = vunpack.c.l.b16 %v239
    %v272 = vunpack.c.l.b16 %v240
    %v273 = vunpack.c.l.b16 %v241
    %v274 = vunpack.c.l.b16 %v242
    %v275 = vpack.c.b16 %v260, %v259
    %v276 = vpack.c.b16 %v262, %v261
    %v277 = vpack.c.b16 %v264, %v263
    %v278 = vpack.c.b16 %v266, %v265
    %v279 = vpack.c.b16 %v268, %v267
    %v280 = vpack.c.b16 %v270, %v269
    %v281 = vpack.c.b16 %v272, %v271
    %v282 = vpack.c.b16 %v274, %v273
    %v307 = vunpack.c.l.b16 %v195
    %v308 = vunpack.c.l.b16 %v196
    %v309 = vunpack.c.l.b16 %v197
    %v310 = vunpack.c.l.b16 %v198
    %v311 = vunpack.c.l.b16 %v199
    %v312 = vunpack.c.l.b16 %v200
    %v313 = vunpack.c.l.b16 %v201
    %v314 = vunpack.c.l.b16 %v202
    %v315 = vunpack.c.l.b16 %v203
    %v316 = vunpack.c.l.b16 %v204
    %v317 = vunpack.c.l.b16 %v205
    %v318 = vunpack.c.l.b16 %v206
    %v319 = vunpack.c.l.b16 %v207
    %v320 = vunpack.c.l.b16 %v208
    %v321 = vunpack.c.l.b16 %v209
    %v322 = vunpack.c.l.b16 %v210
    %v323 = vpack.c.b16 %v308, %v307
    %v324 = vpack.c.b16 %v310, %v309
    %v325 = vpack.c.b16 %v312, %v311
    %v326 = vpack.c.b16 %v314, %v313
    %v327 = vpack.c.b16 %v316, %v315
    %v328 = vpack.c.b16 %v318, %v317
    %v329 = vpack.c.b16 %v320, %v319
    %v330 = vpack.c.b16 %v322, %v321
    %339 = vmatpush.bf16.xpose.msra.mxu0 %v330
    %340 = vmatpush.bf16.xpose.msra.mxu0 %v329
    %341 = vmatpush.bf16.xpose.msra.mxu0 %v328
    %342 = vmatpush.bf16.xpose.msra.mxu0 %v327
    %343 = vmatpush.bf16.xpose.msra.mxu0 %v326
    %344 = vmatpush.bf16.xpose.msra.mxu0 %v325
    %345 = vmatpush.bf16.xpose.msra.mxu0 %v324
    %346 = vmatpush.bf16.xpose.msra.mxu0 %v323
    %347 = vmatmul.bf16.gmra.mxu0 %v275
    %v348 = vpop.f32.mrf.mxu0
    %v349 = vadd.f32 0.0, %v348
    %v350 = vpop.f32.mrf.mxu0
    %v351 = vadd.f32 0.0, %v350
    %352 = vmatmul.bf16.gmra.mxu0 %v276
    %v353 = vpop.f32.mrf.mxu0
    %v354 = vadd.f32 0.0, %v353
    %v355 = vpop.f32.mrf.mxu0
    %v356 = vadd.f32 0.0, %v355
    %357 = vmatmul.bf16.gmra.mxu0 %v277
    %v358 = vpop.f32.mrf.mxu0
    %v359 = vadd.f32 0.0, %v358
    %v360 = vpop.f32.mrf.mxu0
    %v361 = vadd.f32 0.0, %v360
    %362 = vmatmul.bf16.gmra.mxu0 %v278
    %v363 = vpop.f32.mrf.mxu0
    %v364 = vadd.f32 0.0, %v363
    %v365 = vpop.f32.mrf.mxu0
    %v366 = vadd.f32 0.0, %v365
    %367 = vmatmul.bf16.gmra.mxu0 %v279
    %v368 = vpop.f32.mrf.mxu0
    %v369 = vadd.f32 0.0, %v368
    %v370 = vpop.f32.mrf.mxu0
    %v371 = vadd.f32 0.0, %v370
    %372 = vmatmul.bf16.gmra.mxu0 %v280
    %v373 = vpop.f32.mrf.mxu0
    %v374 = vadd.f32 0.0, %v373
    %v375 = vpop.f32.mrf.mxu0
    %v376 = vadd.f32 0.0, %v375
    %377 = vmatmul.bf16.gmra.mxu0 %v281
    %v378 = vpop.f32.mrf.mxu0
    %v379 = vadd.f32 0.0, %v378
    %v380 = vpop.f32.mrf.mxu0
    %v381 = vadd.f32 0.0, %v380
    %382 = vmatmul.bf16.gmra.mxu0 %v282
    %v383 = vpop.f32.mrf.mxu0
    %v384 = vadd.f32 0.0, %v383
    %v385 = vpop.f32.mrf.mxu0
    %v386 = vadd.f32 0.0, %v385
    %387 = vdwg.mxu0
    %s388 = smul.u32 0, 128
    %v389 = vlaneseq
    %v390 = vand.u32 %v389, 127
    %v391 = vstv %s388
    %v392 = vadd.s32 %v391, %v390
    %vm393 = vcmp.lt.s32.totalorder %v392, 8
    %v394 = vsel %vm393, %v349, -1e+30
    %v395 = vsel %vm393, %v351, -1e+30
    %v396 = vsel %vm393, %v354, -1e+30
    %v397 = vsel %vm393, %v356, -1e+30
    %v398 = vsel %vm393, %v359, -1e+30
    %v399 = vsel %vm393, %v361, -1e+30
    %v400 = vsel %vm393, %v364, -1e+30
    %v401 = vsel %vm393, %v366, -1e+30
    %v402 = vsel %vm393, %v369, -1e+30
    %v403 = vsel %vm393, %v371, -1e+30
    %v404 = vsel %vm393, %v374, -1e+30
    %v405 = vsel %vm393, %v376, -1e+30
    %v406 = vsel %vm393, %v379, -1e+30
    %v407 = vsel %vm393, %v381, -1e+30
    %v408 = vsel %vm393, %v384, -1e+30
    %v409 = vsel %vm393, %v386, -1e+30
    %v410 = vld [vmem:[#allocation3] sm:$0xff]
    %v411 = vld [vmem:[#allocation3 + $0x8] sm:$0xff]
    %v412 = vld [vmem:[#allocation3 + $0x10] sm:$0xff]
    %v413 = vld [vmem:[#allocation3 + $0x18] sm:$0xff]
    %v414 = vld [vmem:[#allocation3 + $0x20] sm:$0xff]
    %v415 = vld [vmem:[#allocation3 + $0x28] sm:$0xff]
    %v416 = vld [vmem:[#allocation3 + $0x30] sm:$0xff]
    %v417 = vld [vmem:[#allocation3 + $0x38] sm:$0xff]
    %v418 = vld [vmem:[#allocation3 + $0x40] sm:$0xff]
    %v419 = vld [vmem:[#allocation3 + $0x48] sm:$0xff]
    %v420 = vld [vmem:[#allocation3 + $0x50] sm:$0xff]
    %v421 = vld [vmem:[#allocation3 + $0x58] sm:$0xff]
    %v422 = vld [vmem:[#allocation3 + $0x60] sm:$0xff]
    %v423 = vld [vmem:[#allocation3 + $0x68] sm:$0xff]
    %v424 = vld [vmem:[#allocation3 + $0x70] sm:$0xff]
    %v425 = vld [vmem:[#allocation3 + $0x78] sm:$0xff]
    %426 = vmax.xlane.f32.xlu0 %v394
    %v427 = vpop.xlane.xlu0 %426
    %428 = vmax.xlane.f32.xlu0 %v395
    %v429 = vpop.xlane.xlu0 %428
    %430 = vmax.xlane.f32.xlu0 %v396
    %v431 = vpop.xlane.xlu0 %430
    %432 = vmax.xlane.f32.xlu0 %v397
    %v433 = vpop.xlane.xlu0 %432
    %434 = vmax.xlane.f32.xlu0 %v398
    %v435 = vpop.xlane.xlu0 %434
    %436 = vmax.xlane.f32.xlu0 %v399
    %v437 = vpop.xlane.xlu0 %436
    %438 = vmax.xlane.f32.xlu0 %v400
    %v439 = vpop.xlane.xlu0 %438
    %440 = vmax.xlane.f32.xlu0 %v401
    %v441 = vpop.xlane.xlu0 %440
    %442 = vmax.xlane.f32.xlu0 %v402
    %v443 = vpop.xlane.xlu0 %442
    %444 = vmax.xlane.f32.xlu0 %v403
    %v445 = vpop.xlane.xlu0 %444
    %446 = vmax.xlane.f32.xlu0 %v404
    %v447 = vpop.xlane.xlu0 %446
    %448 = vmax.xlane.f32.xlu0 %v405
    %v449 = vpop.xlane.xlu0 %448
    %450 = vmax.xlane.f32.xlu0 %v406
    %v451 = vpop.xlane.xlu0 %450
    %452 = vmax.xlane.f32.xlu0 %v407
    %v453 = vpop.xlane.xlu0 %452
    %454 = vmax.xlane.f32.xlu0 %v408
    %v455 = vpop.xlane.xlu0 %454
    %456 = vmax.xlane.f32.xlu0 %v409
    %v457 = vpop.xlane.xlu0 %456
    %v458 = vmax.f32 %v410, %v427
    %v459 = vmax.f32 %v411, %v429
    %v460 = vmax.f32 %v412, %v431
    %v461 = vmax.f32 %v413, %v433
    %v462 = vmax.f32 %v414, %v435
    %v463 = vmax.f32 %v415, %v437
    %v464 = vmax.f32 %v416, %v439
    %v465 = vmax.f32 %v417, %v441
    %v466 = vmax.f32 %v418, %v443
    %v467 = vmax.f32 %v419, %v445
    %v468 = vmax.f32 %v420, %v447
    %v469 = vmax.f32 %v421, %v449
    %v470 = vmax.f32 %v422, %v451
    %v471 = vmax.f32 %v423, %v453
    %v472 = vmax.f32 %v424, %v455
    %v473 = vmax.f32 %v425, %v457
    %v474 = vsub.f32 %v410, %v458
    %v475 = vsub.f32 %v411, %v459
    %v476 = vsub.f32 %v412, %v460
    %v477 = vsub.f32 %v413, %v461
    %v478 = vsub.f32 %v414, %v462
    %v479 = vsub.f32 %v415, %v463
    %v480 = vsub.f32 %v416, %v464
    %v481 = vsub.f32 %v417, %v465
    %v482 = vsub.f32 %v418, %v466
    %v483 = vsub.f32 %v419, %v467
    %v484 = vsub.f32 %v420, %v468
    %v485 = vsub.f32 %v421, %v469
    %v486 = vsub.f32 %v422, %v470
    %v487 = vsub.f32 %v423, %v471
    %v488 = vsub.f32 %v424, %v472
    %v489 = vsub.f32 %v425, %v473
    %v490 = vpow.pop %v474
    %v491 = vpow.pop %v475
    %v492 = vpow.pop %v476
    %v493 = vpow.pop %v477
    %v494 = vpow.pop %v478
    %v495 = vpow.pop %v479
    %v496 = vpow.pop %v480
    %v497 = vpow.pop %v481
    %v498 = vpow.pop %v482
    %v499 = vpow.pop %v483
    %v500 = vpow.pop %v484
    %v501 = vpow.pop %v485
    %v502 = vpow.pop %v486
    %v503 = vpow.pop %v487
    %v504 = vpow.pop %v488
    %v505 = vpow.pop %v489
    %507 = vset.pattern.permute.xlu0 0
    %508 = vperm.xlu0 %507, %v458
    %v509 = vpop.permute.xlu0 %508
    %512 = vset.pattern.permute.xlu0 0
    %513 = vperm.xlu0 %512, %v459
    %v514 = vpop.permute.xlu0 %513
    %517 = vset.pattern.permute.xlu0 0
    %518 = vperm.xlu0 %517, %v460
    %v519 = vpop.permute.xlu0 %518
    %522 = vset.pattern.permute.xlu0 0
    %523 = vperm.xlu0 %522, %v461
    %v524 = vpop.permute.xlu0 %523
    %527 = vset.pattern.permute.xlu0 0
    %528 = vperm.xlu0 %527, %v462
    %v529 = vpop.permute.xlu0 %528
    %532 = vset.pattern.permute.xlu0 0
    %533 = vperm.xlu0 %532, %v463
    %v534 = vpop.permute.xlu0 %533
    %537 = vset.pattern.permute.xlu0 0
    %538 = vperm.xlu0 %537, %v464
    %v539 = vpop.permute.xlu0 %538
    %542 = vset.pattern.permute.xlu0 0
    %543 = vperm.xlu0 %542, %v465
    %v544 = vpop.permute.xlu0 %543
    %547 = vset.pattern.permute.xlu0 0
    %548 = vperm.xlu0 %547, %v466
    %v549 = vpop.permute.xlu0 %548
    %552 = vset.pattern.permute.xlu0 0
    %553 = vperm.xlu0 %552, %v467
    %v554 = vpop.permute.xlu0 %553
    %557 = vset.pattern.permute.xlu0 0
    %558 = vperm.xlu0 %557, %v468
    %v559 = vpop.permute.xlu0 %558
    %562 = vset.pattern.permute.xlu0 0
    %563 = vperm.xlu0 %562, %v469
    %v564 = vpop.permute.xlu0 %563
    %567 = vset.pattern.permute.xlu0 0
    %568 = vperm.xlu0 %567, %v470
    %v569 = vpop.permute.xlu0 %568
    %572 = vset.pattern.permute.xlu0 0
    %573 = vperm.xlu0 %572, %v471
    %v574 = vpop.permute.xlu0 %573
    %577 = vset.pattern.permute.xlu0 0
    %578 = vperm.xlu0 %577, %v472
    %v579 = vpop.permute.xlu0 %578
    %582 = vset.pattern.permute.xlu0 0
    %583 = vperm.xlu0 %582, %v473
    %v584 = vpop.permute.xlu0 %583
    %v586 = vsub.f32 %v394, %v509
    %v587 = vsub.f32 %v395, %v514
    %v588 = vsub.f32 %v396, %v519
    %v589 = vsub.f32 %v397, %v524
    %v590 = vsub.f32 %v398, %v529
    %v591 = vsub.f32 %v399, %v534
    %v592 = vsub.f32 %v400, %v539
    %v593 = vsub.f32 %v401, %v544
    %v594 = vsub.f32 %v402, %v549
    %v595 = vsub.f32 %v403, %v554
    %v596 = vsub.f32 %v404, %v559
    %v597 = vsub.f32 %v405, %v564
    %v598 = vsub.f32 %v406, %v569
    %v599 = vsub.f32 %v407, %v574
    %v600 = vsub.f32 %v408, %v579
    %v601 = vsub.f32 %v409, %v584
    %v602 = vpow.pop %v586
    %v603 = vpow.pop %v587
    %v604 = vpow.pop %v588
    %v605 = vpow.pop %v589
    %v606 = vpow.pop %v590
    %v607 = vpow.pop %v591
    %v608 = vpow.pop %v592
    %v609 = vpow.pop %v593
    %v610 = vpow.pop %v594
    %v611 = vpow.pop %v595
    %v612 = vpow.pop %v596
    %v613 = vpow.pop %v597
    %v614 = vpow.pop %v598
    %v615 = vpow.pop %v599
    %v616 = vpow.pop %v600
    %v617 = vpow.pop %v601
    %v618 = vld [vmem:[#allocation4] sm:$0xff]
    %v619 = vld [vmem:[#allocation4 + $0x8] sm:$0xff]
    %v620 = vld [vmem:[#allocation4 + $0x10] sm:$0xff]
    %v621 = vld [vmem:[#allocation4 + $0x18] sm:$0xff]
    %v622 = vld [vmem:[#allocation4 + $0x20] sm:$0xff]
    %v623 = vld [vmem:[#allocation4 + $0x28] sm:$0xff]
    %v624 = vld [vmem:[#allocation4 + $0x30] sm:$0xff]
    %v625 = vld [vmem:[#allocation4 + $0x38] sm:$0xff]
    %v626 = vld [vmem:[#allocation4 + $0x40] sm:$0xff]
    %v627 = vld [vmem:[#allocation4 + $0x48] sm:$0xff]
    %v628 = vld [vmem:[#allocation4 + $0x50] sm:$0xff]
    %v629 = vld [vmem:[#allocation4 + $0x58] sm:$0xff]
    %v630 = vld [vmem:[#allocation4 + $0x60] sm:$0xff]
    %v631 = vld [vmem:[#allocation4 + $0x68] sm:$0xff]
    %v632 = vld [vmem:[#allocation4 + $0x70] sm:$0xff]
    %v633 = vld [vmem:[#allocation4 + $0x78] sm:$0xff]
    %v634 = vmul.f32 %v490, %v618
    %v635 = vmul.f32 %v491, %v619
    %v636 = vmul.f32 %v492, %v620
    %v637 = vmul.f32 %v493, %v621
    %v638 = vmul.f32 %v494, %v622
    %v639 = vmul.f32 %v495, %v623
    %v640 = vmul.f32 %v496, %v624
    %v641 = vmul.f32 %v497, %v625
    %v642 = vmul.f32 %v498, %v626
    %v643 = vmul.f32 %v499, %v627
    %v644 = vmul.f32 %v500, %v628
    %v645 = vmul.f32 %v501, %v629
    %v646 = vmul.f32 %v502, %v630
    %v647 = vmul.f32 %v503, %v631
    %v648 = vmul.f32 %v504, %v632
    %v649 = vmul.f32 %v505, %v633
    %650 = vadd.xlane.f32.xlu0 %v602
    %v651 = vpop.xlane.xlu0 %650
    %652 = vadd.xlane.f32.xlu0 %v603
    %v653 = vpop.xlane.xlu0 %652
    %654 = vadd.xlane.f32.xlu0 %v604
    %v655 = vpop.xlane.xlu0 %654
    %656 = vadd.xlane.f32.xlu0 %v605
    %v657 = vpop.xlane.xlu0 %656
    %658 = vadd.xlane.f32.xlu0 %v606
    %v659 = vpop.xlane.xlu0 %658
    %660 = vadd.xlane.f32.xlu0 %v607
    %v661 = vpop.xlane.xlu0 %660
    %662 = vadd.xlane.f32.xlu0 %v608
    %v663 = vpop.xlane.xlu0 %662
    %664 = vadd.xlane.f32.xlu0 %v609
    %v665 = vpop.xlane.xlu0 %664
    %666 = vadd.xlane.f32.xlu0 %v610
    %v667 = vpop.xlane.xlu0 %666
    %668 = vadd.xlane.f32.xlu0 %v611
    %v669 = vpop.xlane.xlu0 %668
    %670 = vadd.xlane.f32.xlu0 %v612
    %v671 = vpop.xlane.xlu0 %670
    %672 = vadd.xlane.f32.xlu0 %v613
    %v673 = vpop.xlane.xlu0 %672
    %674 = vadd.xlane.f32.xlu0 %v614
    %v675 = vpop.xlane.xlu0 %674
    %676 = vadd.xlane.f32.xlu0 %v615
    %v677 = vpop.xlane.xlu0 %676
    %678 = vadd.xlane.f32.xlu0 %v616
    %v679 = vpop.xlane.xlu0 %678
    %680 = vadd.xlane.f32.xlu0 %v617
    %v681 = vpop.xlane.xlu0 %680
    %v682 = vadd.f32 %v634, %v651
    %v683 = vadd.f32 %v635, %v653
    %v684 = vadd.f32 %v636, %v655
    %v685 = vadd.f32 %v637, %v657
    %v686 = vadd.f32 %v638, %v659
    %v687 = vadd.f32 %v639, %v661
    %v688 = vadd.f32 %v640, %v663
    %v689 = vadd.f32 %v641, %v665
    %v690 = vadd.f32 %v642, %v667
    %v691 = vadd.f32 %v643, %v669
    %v692 = vadd.f32 %v644, %v671
    %v693 = vadd.f32 %v645, %v673
    %v694 = vadd.f32 %v646, %v675
    %v695 = vadd.f32 %v647, %v677
    %v696 = vadd.f32 %v648, %v679
    %v697 = vadd.f32 %v649, %v681
    %vm698 = vcmask 7168
    %699 = vst.msk [vmem:[#allocation4] sm:$0xff] %vm698, %v682
    %700 = vst.msk [vmem:[#allocation4 + $0x8] sm:$0xff] %vm698, %v683
    %701 = vst.msk [vmem:[#allocation4 + $0x10] sm:$0xff] %vm698, %v684
    %702 = vst.msk [vmem:[#allocation4 + $0x18] sm:$0xff] %vm698, %v685
    %703 = vst.msk [vmem:[#allocation4 + $0x20] sm:$0xff] %vm698, %v686
    %704 = vst.msk [vmem:[#allocation4 + $0x28] sm:$0xff] %vm698, %v687
    %705 = vst.msk [vmem:[#allocation4 + $0x30] sm:$0xff] %vm698, %v688
    %706 = vst.msk [vmem:[#allocation4 + $0x38] sm:$0xff] %vm698, %v689
    %707 = vst.msk [vmem:[#allocation4 + $0x40] sm:$0xff] %vm698, %v690
    %708 = vst.msk [vmem:[#allocation4 + $0x48] sm:$0xff] %vm698, %v691
    %709 = vst.msk [vmem:[#allocation4 + $0x50] sm:$0xff] %vm698, %v692
    %710 = vst.msk [vmem:[#allocation4 + $0x58] sm:$0xff] %vm698, %v693
    %711 = vst.msk [vmem:[#allocation4 + $0x60] sm:$0xff] %vm698, %v694
    %712 = vst.msk [vmem:[#allocation4 + $0x68] sm:$0xff] %vm698, %v695
    %713 = vst.msk [vmem:[#allocation4 + $0x70] sm:$0xff] %vm698, %v696
    %714 = vst.msk [vmem:[#allocation4 + $0x78] sm:$0xff] %vm698, %v697
    %v715 = vld [vmem:[#allocation5] sm:$0xff]
    %v716 = vld [vmem:[#allocation5 + $0x8] sm:$0xff]
    %v717 = vld [vmem:[#allocation5 + $0x10] sm:$0xff]
    %v718 = vld [vmem:[#allocation5 + $0x18] sm:$0xff]
    %v719 = vld [vmem:[#allocation5 + $0x20] sm:$0xff]
    %v720 = vld [vmem:[#allocation5 + $0x28] sm:$0xff]
    %v721 = vld [vmem:[#allocation5 + $0x30] sm:$0xff]
    %v722 = vld [vmem:[#allocation5 + $0x38] sm:$0xff]
    %v723 = vld [vmem:[#allocation5 + $0x40] sm:$0xff]
    %v724 = vld [vmem:[#allocation5 + $0x48] sm:$0xff]
    %v725 = vld [vmem:[#allocation5 + $0x50] sm:$0xff]
    %v726 = vld [vmem:[#allocation5 + $0x58] sm:$0xff]
    %v727 = vld [vmem:[#allocation5 + $0x60] sm:$0xff]
    %v728 = vld [vmem:[#allocation5 + $0x68] sm:$0xff]
    %v729 = vld [vmem:[#allocation5 + $0x70] sm:$0xff]
    %v730 = vld [vmem:[#allocation5 + $0x78] sm:$0xff]
    %732 = vset.pattern.permute.xlu0 0
    %733 = vperm.xlu0 %732, %v490
    %v734 = vpop.permute.xlu0 %733
    %737 = vset.pattern.permute.xlu0 0
    %738 = vperm.xlu0 %737, %v491
    %v739 = vpop.permute.xlu0 %738
    %742 = vset.pattern.permute.xlu0 0
    %743 = vperm.xlu0 %742, %v492
    %v744 = vpop.permute.xlu0 %743
    %747 = vset.pattern.permute.xlu0 0
    %748 = vperm.xlu0 %747, %v493
    %v749 = vpop.permute.xlu0 %748
    %752 = vset.pattern.permute.xlu0 0
    %753 = vperm.xlu0 %752, %v494
    %v754 = vpop.permute.xlu0 %753
    %757 = vset.pattern.permute.xlu0 0
    %758 = vperm.xlu0 %757, %v495
    %v759 = vpop.permute.xlu0 %758
    %762 = vset.pattern.permute.xlu0 0
    %763 = vperm.xlu0 %762, %v496
    %v764 = vpop.permute.xlu0 %763
    %767 = vset.pattern.permute.xlu0 0
    %768 = vperm.xlu0 %767, %v497
    %v769 = vpop.permute.xlu0 %768
    %772 = vset.pattern.permute.xlu0 0
    %773 = vperm.xlu0 %772, %v498
    %v774 = vpop.permute.xlu0 %773
    %777 = vset.pattern.permute.xlu0 0
    %778 = vperm.xlu0 %777, %v499
    %v779 = vpop.permute.xlu0 %778
    %782 = vset.pattern.permute.xlu0 0
    %783 = vperm.xlu0 %782, %v500
    %v784 = vpop.permute.xlu0 %783
    %787 = vset.pattern.permute.xlu0 0
    %788 = vperm.xlu0 %787, %v501
    %v789 = vpop.permute.xlu0 %788
    %792 = vset.pattern.permute.xlu0 0
    %793 = vperm.xlu0 %792, %v502
    %v794 = vpop.permute.xlu0 %793
    %797 = vset.pattern.permute.xlu0 0
    %798 = vperm.xlu0 %797, %v503
    %v799 = vpop.permute.xlu0 %798
    %802 = vset.pattern.permute.xlu0 0
    %803 = vperm.xlu0 %802, %v504
    %v804 = vpop.permute.xlu0 %803
    %807 = vset.pattern.permute.xlu0 0
    %808 = vperm.xlu0 %807, %v505
    %v809 = vpop.permute.xlu0 %808
    %v811 = vmul.f32 %v734, %v715
    %v812 = vmul.f32 %v739, %v716
    %v813 = vmul.f32 %v744, %v717
    %v814 = vmul.f32 %v749, %v718
    %v815 = vmul.f32 %v754, %v719
    %v816 = vmul.f32 %v759, %v720
    %v817 = vmul.f32 %v764, %v721
    %v818 = vmul.f32 %v769, %v722
    %v819 = vmul.f32 %v774, %v723
    %v820 = vmul.f32 %v779, %v724
    %v821 = vmul.f32 %v784, %v725
    %v822 = vmul.f32 %v789, %v726
    %v823 = vmul.f32 %v794, %v727
    %v824 = vmul.f32 %v799, %v728
    %v825 = vmul.f32 %v804, %v729
    %v826 = vmul.f32 %v809, %v730
    %v827 = vpack.c.bf16 %v603, %v602
    %v828 = vpack.c.bf16 %v605, %v604
    %v829 = vpack.c.bf16 %v607, %v606
    %v830 = vpack.c.bf16 %v609, %v608
    %v831 = vpack.c.bf16 %v611, %v610
    %v832 = vpack.c.bf16 %v613, %v612
    %v833 = vpack.c.bf16 %v615, %v614
    %v834 = vpack.c.bf16 %v617, %v616
    %v851 = vunpack.c.l.b16 %v211
    %v852 = vunpack.c.l.b16 %v212
    %v853 = vunpack.c.l.b16 %v213
    %v854 = vunpack.c.l.b16 %v214
    %v855 = vunpack.c.l.b16 %v215
    %v856 = vunpack.c.l.b16 %v216
    %v857 = vunpack.c.l.b16 %v217
    %v858 = vunpack.c.l.b16 %v218
    %v859 = vunpack.c.l.b16 %v219
    %v860 = vunpack.c.l.b16 %v220
    %v861 = vunpack.c.l.b16 %v221
    %v862 = vunpack.c.l.b16 %v222
    %v863 = vunpack.c.l.b16 %v223
    %v864 = vunpack.c.l.b16 %v224
    %v865 = vunpack.c.l.b16 %v225
    %v866 = vunpack.c.l.b16 %v226
    %v867 = vpack.c.b16 %v852, %v851
    %v868 = vpack.c.b16 %v854, %v853
    %v869 = vpack.c.b16 %v856, %v855
    %v870 = vpack.c.b16 %v858, %v857
    %v871 = vpack.c.b16 %v860, %v859
    %v872 = vpack.c.b16 %v862, %v861
    %v873 = vpack.c.b16 %v864, %v863
    %v874 = vpack.c.b16 %v866, %v865
    %883 = vmatpush.bf16.msra.mxu0 %v874
    %884 = vmatpush.bf16.msra.mxu0 %v873
    %885 = vmatpush.bf16.msra.mxu0 %v872
    %886 = vmatpush.bf16.msra.mxu0 %v871
    %887 = vmatpush.bf16.msra.mxu0 %v870
    %888 = vmatpush.bf16.msra.mxu0 %v869
    %889 = vmatpush.bf16.msra.mxu0 %v868
    %890 = vmatpush.bf16.msra.mxu0 %v867
    %891 = vmatmul.bf16.gmra.mxu0 %v827
    %v892 = vpop.f32.mrf.mxu0
    %v893 = vadd.f32 0.0, %v892
    %v894 = vpop.f32.mrf.mxu0
    %v895 = vadd.f32 0.0, %v894
    %896 = vmatmul.bf16.gmra.mxu0 %v828
    %v897 = vpop.f32.mrf.mxu0
    %v898 = vadd.f32 0.0, %v897
    %v899 = vpop.f32.mrf.mxu0
    %v900 = vadd.f32 0.0, %v899
    %901 = vmatmul.bf16.gmra.mxu0 %v829
    %v902 = vpop.f32.mrf.mxu0
    %v903 = vadd.f32 0.0, %v902
    %v904 = vpop.f32.mrf.mxu0
    %v905 = vadd.f32 0.0, %v904
    %906 = vmatmul.bf16.gmra.mxu0 %v830
    %v907 = vpop.f32.mrf.mxu0
    %v908 = vadd.f32 0.0, %v907
    %v909 = vpop.f32.mrf.mxu0
    %v910 = vadd.f32 0.0, %v909
    %911 = vmatmul.bf16.gmra.mxu0 %v831
    %v912 = vpop.f32.mrf.mxu0
    %v913 = vadd.f32 0.0, %v912
    %v914 = vpop.f32.mrf.mxu0
    %v915 = vadd.f32 0.0, %v914
    %916 = vmatmul.bf16.gmra.mxu0 %v832
    %v917 = vpop.f32.mrf.mxu0
    %v918 = vadd.f32 0.0, %v917
    %v919 = vpop.f32.mrf.mxu0
    %v920 = vadd.f32 0.0, %v919
    %921 = vmatmul.bf16.gmra.mxu0 %v833
    %v922 = vpop.f32.mrf.mxu0
    %v923 = vadd.f32 0.0, %v922
    %v924 = vpop.f32.mrf.mxu0
    %v925 = vadd.f32 0.0, %v924
    %926 = vmatmul.bf16.gmra.mxu0 %v834
    %v927 = vpop.f32.mrf.mxu0
    %v928 = vadd.f32 0.0, %v927
    %v929 = vpop.f32.mrf.mxu0
    %v930 = vadd.f32 0.0, %v929
    %931 = vdwg.mxu0
    %v932 = vadd.f32 %v811, %v893
    %v933 = vadd.f32 %v812, %v895
    %v934 = vadd.f32 %v813, %v898
    %v935 = vadd.f32 %v814, %v900
    %v936 = vadd.f32 %v815, %v903
    %v937 = vadd.f32 %v816, %v905
    %v938 = vadd.f32 %v817, %v908
    %v939 = vadd.f32 %v818, %v910
    %v940 = vadd.f32 %v819, %v913
    %v941 = vadd.f32 %v820, %v915
    %v942 = vadd.f32 %v821, %v918
    %v943 = vadd.f32 %v822, %v920
    %v944 = vadd.f32 %v823, %v923
    %v945 = vadd.f32 %v824, %v925
    %v946 = vadd.f32 %v825, %v928
    %v947 = vadd.f32 %v826, %v930
    %948 = vst [vmem:[#allocation5] sm:$0xff] %v932
    %949 = vst [vmem:[#allocation5 + $0x8] sm:$0xff] %v933
    %950 = vst [vmem:[#allocation5 + $0x10] sm:$0xff] %v934
    %951 = vst [vmem:[#allocation5 + $0x18] sm:$0xff] %v935
    %952 = vst [vmem:[#allocation5 + $0x20] sm:$0xff] %v936
    %953 = vst [vmem:[#allocation5 + $0x28] sm:$0xff] %v937
    %954 = vst [vmem:[#allocation5 + $0x30] sm:$0xff] %v938
    %955 = vst [vmem:[#allocation5 + $0x38] sm:$0xff] %v939
    %956 = vst [vmem:[#allocation5 + $0x40] sm:$0xff] %v940
    %957 = vst [vmem:[#allocation5 + $0x48] sm:$0xff] %v941
    %958 = vst [vmem:[#allocation5 + $0x50] sm:$0xff] %v942
    %959 = vst [vmem:[#allocation5 + $0x58] sm:$0xff] %v943
    %960 = vst [vmem:[#allocation5 + $0x60] sm:$0xff] %v944
    %961 = vst [vmem:[#allocation5 + $0x68] sm:$0xff] %v945
    %962 = vst [vmem:[#allocation5 + $0x70] sm:$0xff] %v946
    %963 = vst [vmem:[#allocation5 + $0x78] sm:$0xff] %v947
    %964 = vst.msk [vmem:[#allocation3] sm:$0xff] %vm698, %v458
    %965 = vst.msk [vmem:[#allocation3 + $0x8] sm:$0xff] %vm698, %v459
    %966 = vst.msk [vmem:[#allocation3 + $0x10] sm:$0xff] %vm698, %v460
    %967 = vst.msk [vmem:[#allocation3 + $0x18] sm:$0xff] %vm698, %v461
    %968 = vst.msk [vmem:[#allocation3 + $0x20] sm:$0xff] %vm698, %v462
    %969 = vst.msk [vmem:[#allocation3 + $0x28] sm:$0xff] %vm698, %v463
    %970 = vst.msk [vmem:[#allocation3 + $0x30] sm:$0xff] %vm698, %v464
    %971 = vst.msk [vmem:[#allocation3 + $0x38] sm:$0xff] %vm698, %v465
    %972 = vst.msk [vmem:[#allocation3 + $0x40] sm:$0xff] %vm698, %v466
    %973 = vst.msk [vmem:[#allocation3 + $0x48] sm:$0xff] %vm698, %v467
    %974 = vst.msk [vmem:[#allocation3 + $0x50] sm:$0xff] %vm698, %v468
    %975 = vst.msk [vmem:[#allocation3 + $0x58] sm:$0xff] %vm698, %v469
    %976 = vst.msk [vmem:[#allocation3 + $0x60] sm:$0xff] %vm698, %v470
    %977 = vst.msk [vmem:[#allocation3 + $0x68] sm:$0xff] %vm698, %v471
    %978 = vst.msk [vmem:[#allocation3 + $0x70] sm:$0xff] %vm698, %v472
    %979 = vst.msk [vmem:[#allocation3 + $0x78] sm:$0xff] %vm698, %v473
    // Predicated region
    $region30: #{tpu_custom_call.1} parent=1 // pred_check
      %p980 = pneg %p62
    $region31: #{tpu_custom_call.1} parent=1 // pred_check_branch
      %982 = sbr.rel (%p980) target = $region33
    $region32: #{tpu_custom_call.1} parent=1 // pred_region
      %v983 = vld [vmem:[#allocation4] sm:$0xff]
      %v984 = vld [vmem:[#allocation4 + $0x8] sm:$0xff]
      %v985 = vld [vmem:[#allocation4 + $0x10] sm:$0xff]
      %v986 = vld [vmem:[#allocation4 + $0x18] sm:$0xff]
      %v987 = vld [vmem:[#allocation4 + $0x20] sm:$0xff]
      %v988 = vld [vmem:[#allocation4 + $0x28] sm:$0xff]
      %v989 = vld [vmem:[#allocation4 + $0x30] sm:$0xff]
      %v990 = vld [vmem:[#allocation4 + $0x38] sm:$0xff]
      %v991 = vld [vmem:[#allocation4 + $0x40] sm:$0xff]
      %v992 = vld [vmem:[#allocation4 + $0x48] sm:$0xff]
      %v993 = vld [vmem:[#allocation4 + $0x50] sm:$0xff]
      %v994 = vld [vmem:[#allocation4 + $0x58] sm:$0xff]
      %v995 = vld [vmem:[#allocation4 + $0x60] sm:$0xff]
      %v996 = vld [vmem:[#allocation4 + $0x68] sm:$0xff]
      %v997 = vld [vmem:[#allocation4 + $0x70] sm:$0xff]
      %v998 = vld [vmem:[#allocation4 + $0x78] sm:$0xff]
      %v999 = vrcp.pop %v983
      %v1000 = vrcp.pop %v984
      %v1001 = vrcp.pop %v985
      %v1002 = vrcp.pop %v986
      %v1003 = vrcp.pop %v987
      %v1004 = vrcp.pop %v988
      %v1005 = vrcp.pop %v989
      %v1006 = vrcp.pop %v990
      %v1007 = vrcp.pop %v991
      %v1008 = vrcp.pop %v992
      %v1009 = vrcp.pop %v993
      %v1010 = vrcp.pop %v994
      %v1011 = vrcp.pop %v995
      %v1012 = vrcp.pop %v996
      %v1013 = vrcp.pop %v997
      %v1014 = vrcp.pop %v998
      %v1015 = vld [vmem:[#allocation5] sm:$0xff]
      %v1016 = vld [vmem:[#allocation5 + $0x8] sm:$0xff]
      %v1017 = vld [vmem:[#allocation5 + $0x10] sm:$0xff]
      %v1018 = vld [vmem:[#allocation5 + $0x18] sm:$0xff]
      %v1019 = vld [vmem:[#allocation5 + $0x20] sm:$0xff]
      %v1020 = vld [vmem:[#allocation5 + $0x28] sm:$0xff]
      %v1021 = vld [vmem:[#allocation5 + $0x30] sm:$0xff]
      %v1022 = vld [vmem:[#allocation5 + $0x38] sm:$0xff]
      %v1023 = vld [vmem:[#allocation5 + $0x40] sm:$0xff]
      %v1024 = vld [vmem:[#allocation5 + $0x48] sm:$0xff]
      %v1025 = vld [vmem:[#allocation5 + $0x50] sm:$0xff]
      %v1026 = vld [vmem:[#allocation5 + $0x58] sm:$0xff]
      %v1027 = vld [vmem:[#allocation5 + $0x60] sm:$0xff]
      %v1028 = vld [vmem:[#allocation5 + $0x68] sm:$0xff]
      %v1029 = vld [vmem:[#allocation5 + $0x70] sm:$0xff]
      %v1030 = vld [vmem:[#allocation5 + $0x78] sm:$0xff]
      %1032 = vset.pattern.permute.xlu0 0
      %1033 = vperm.xlu0 %1032, %v999
      %v1034 = vpop.permute.xlu0 %1033
      %1037 = vset.pattern.permute.xlu0 0
      %1038 = vperm.xlu0 %1037, %v1000
      %v1039 = vpop.permute.xlu0 %1038
      %1042 = vset.pattern.permute.xlu0 0
      %1043 = vperm.xlu0 %1042, %v1001
      %v1044 = vpop.permute.xlu0 %1043
      %1047 = vset.pattern.permute.xlu0 0
      %1048 = vperm.xlu0 %1047, %v1002
      %v1049 = vpop.permute.xlu0 %1048
      %1052 = vset.pattern.permute.xlu0 0
      %1053 = vperm.xlu0 %1052, %v1003
      %v1054 = vpop.permute.xlu0 %1053
      %1057 = vset.pattern.permute.xlu0 0
      %1058 = vperm.xlu0 %1057, %v1004
      %v1059 = vpop.permute.xlu0 %1058
      %1062 = vset.pattern.permute.xlu0 0
      %1063 = vperm.xlu0 %1062, %v1005
      %v1064 = vpop.permute.xlu0 %1063
      %1067 = vset.pattern.permute.xlu0 0
      %1068 = vperm.xlu0 %1067, %v1006
      %v1069 = vpop.permute.xlu0 %1068
      %1072 = vset.pattern.permute.xlu0 0
      %1073 = vperm.xlu0 %1072, %v1007
      %v1074 = vpop.permute.xlu0 %1073
      %1077 = vset.pattern.permute.xlu0 0
      %1078 = vperm.xlu0 %1077, %v1008
      %v1079 = vpop.permute.xlu0 %1078
      %1082 = vset.pattern.permute.xlu0 0
      %1083 = vperm.xlu0 %1082, %v1009
      %v1084 = vpop.permute.xlu0 %1083
      %1087 = vset.pattern.permute.xlu0 0
      %1088 = vperm.xlu0 %1087, %v1010
      %v1089 = vpop.permute.xlu0 %1088
      %1092 = vset.pattern.permute.xlu0 0
      %1093 = vperm.xlu0 %1092, %v1011
      %v1094 = vpop.permute.xlu0 %1093
      %1097 = vset.pattern.permute.xlu0 0
      %1098 = vperm.xlu0 %1097, %v1012
      %v1099 = vpop.permute.xlu0 %1098
      %1102 = vset.pattern.permute.xlu0 0
      %1103 = vperm.xlu0 %1102, %v1013
      %v1104 = vpop.permute.xlu0 %1103
      %1107 = vset.pattern.permute.xlu0 0
      %1108 = vperm.xlu0 %1107, %v1014
      %v1109 = vpop.permute.xlu0 %1108
      %v1111 = vmul.f32 %v1015, %v1034
      %v1112 = vmul.f32 %v1016, %v1039
      %v1113 = vmul.f32 %v1017, %v1044
      %v1114 = vmul.f32 %v1018, %v1049
      %v1115 = vmul.f32 %v1019, %v1054
      %v1116 = vmul.f32 %v1020, %v1059
      %v1117 = vmul.f32 %v1021, %v1064
      %v1118 = vmul.f32 %v1022, %v1069
      %v1119 = vmul.f32 %v1023, %v1074
      %v1120 = vmul.f32 %v1024, %v1079
      %v1121 = vmul.f32 %v1025, %v1084
      %v1122 = vmul.f32 %v1026, %v1089
      %v1123 = vmul.f32 %v1027, %v1094
      %v1124 = vmul.f32 %v1028, %v1099
      %v1125 = vmul.f32 %v1029, %v1104
      %v1126 = vmul.f32 %v1030, %v1109
      %1127 = vst [vmem:[#allocation12] sm:$0xff] %v1111
      %1128 = vst [vmem:[#allocation12 + $0x8] sm:$0xff] %v1112
      %1129 = vst [vmem:[#allocation12 + $0x10] sm:$0xff] %v1113
      %1130 = vst [vmem:[#allocation12 + $0x18] sm:$0xff] %v1114
      %1131 = vst [vmem:[#allocation12 + $0x20] sm:$0xff] %v1115
      %1132 = vst [vmem:[#allocation12 + $0x28] sm:$0xff] %v1116
      %1133 = vst [vmem:[#allocation12 + $0x30] sm:$0xff] %v1117
      %1134 = vst [vmem:[#allocation12 + $0x38] sm:$0xff] %v1118
      %1135 = vst [vmem:[#allocation12 + $0x40] sm:$0xff] %v1119
      %1136 = vst [vmem:[#allocation12 + $0x48] sm:$0xff] %v1120
      %1137 = vst [vmem:[#allocation12 + $0x50] sm:$0xff] %v1121
      %1138 = vst [vmem:[#allocation12 + $0x58] sm:$0xff] %v1122
      %1139 = vst [vmem:[#allocation12 + $0x60] sm:$0xff] %v1123
      %1140 = vst [vmem:[#allocation12 + $0x68] sm:$0xff] %v1124
      %1141 = vst [vmem:[#allocation12 + $0x70] sm:$0xff] %v1125
      %1142 = vst [vmem:[#allocation12 + $0x78] sm:$0xff] %v1126
    $region33: #{tpu_custom_call.1} parent=1 // pred_fallthru
      _
    // Predicated region
    $region34: #{tpu_custom_call.1} parent=1 // pred_check
      _
    $region35: #{tpu_custom_call.1} parent=1 // pred_check_branch
      %1144 = sbr.rel (0) target = $region37
    $region36: #{tpu_custom_call.1} parent=1 // pred_region
      %1146 = vsyncadd [#allocation8], 0
      %s1147 = sshll.u32 [#allocation12], 4
      %s1148 = int_to_ptr.vmem [resolvable:$true] %s1147
      %s1149 = sshll.u32 %s3, 4
      %s1150 = int_to_ptr.hbm [resolvable:$true] %s1149
      %1155 = dma.vmem_to_hbm [thread:$0]  %s1148, 2048, %s1150, [#allocation8], 128, 128, 8
    $region37: #{tpu_custom_call.1} parent=1 // pred_fallthru
      _
    // Predicated region
    $region38: #{tpu_custom_call.1} parent=1 // pred_check
      _
    $region39: #{tpu_custom_call.1} parent=1 // pred_check_branch
      %1157 = sbr.rel (0) target = $region41
    $region40: #{tpu_custom_call.1} parent=1 // pred_region
      %1159 = dma.done [#allocation8], 2048
    $region41: #{tpu_custom_call.1} parent=1 // pred_fallthru
      _
    %1160 = vsyncpa [#allocation7], 1
    %1161 = vsyncpa [#allocation10], 1
    %1162 = vsyncpa [#allocation8], 1

</llo_original>
